<compile_context>
chip_gen: v5e
topology: v5e:2x2
jax: 0.10.0
libtpu: 0.0.40
codegen_flags: <defaults>
</compile_context>

<pallas_src>
import functools

import jax
import jax.numpy as jnp
from jax import lax
from jax.experimental import pallas as pl
from jax.experimental.pallas import tpu as pltpu


_LANES = 128


def _eye_mask(rows, cols):
    r = lax.broadcasted_iota(jnp.int32, (rows, cols), 0)
    c = lax.broadcasted_iota(jnp.int32, (rows, cols), 1)
    return r == c


def _cross_en_kernel(x_ref, o_ref, *, tm, n, diag_mode):
    """One (tm, n) row block -> lane-dense (1, tm) row of -log p(diag)."""
    i = pl.program_id(0)

    x = x_ref[...].astype(jnp.float32)                                   # (tm, n)

    # Row-wise logsumexp (numerically stable).
    m = jnp.max(x, axis=-1, keepdims=True)                               # (tm, 1)
    lse = jnp.log(jnp.sum(jnp.exp(x - m), axis=-1, keepdims=True)) + m   # (tm, 1)

    if diag_mode == "subblock":
        # tm % 128 == 0: the diagonal of global rows [i*tm, i*tm+tm) lives in
        # the (tm, tm) square starting at column i*tm.  Walk it as tm/128
        # diagonal 128x128 sub-blocks with 128-aligned lane slices; reduce
        # over sublanes so the result comes out lane-dense directly.
        eye = _eye_mask(_LANES, _LANES)
        for j in range(tm // _LANES):
            col0 = pl.multiple_of(i * tm + j * _LANES, _LANES)
            blk = x_ref[j * _LANES:(j + 1) * _LANES, pl.ds(col0, _LANES)]
            blk = blk.astype(jnp.float32)                                # (128, 128)
            lse_j = lse[j * _LANES:(j + 1) * _LANES]                     # (128, 1)
            out_j = jnp.sum(jnp.where(eye, lse_j - blk, 0.0),
                            axis=0, keepdims=True)                       # (1, 128)
            o_ref[:, j * _LANES:(j + 1) * _LANES] = out_j
    elif diag_mode == "single":
        # Single row block covering all rows: the diagonal square is the whole
        # block at a static offset of 0 (n == tm).
        eye = _eye_mask(tm, tm)
        o_ref[...] = jnp.sum(jnp.where(eye, lse - x, 0.0),
                             axis=0, keepdims=True)                      # (1, tm)
    else:
        # Rare fallback (tm % 128 != 0 with more than one tile): full-width
        # mask, then lane-densify the (tm, 1) column via a diagonal scatter
        # and a sublane reduction (avoids any unaligned dynamic lane slice).
        row = lax.broadcasted_iota(jnp.int32, (tm, n), 0) + i * tm
        col = lax.broadcasted_iota(jnp.int32, (tm, n), 1)
        diag = jnp.sum(jnp.where(row == col, x, 0.0),
                       axis=-1, keepdims=True)                           # (tm, 1)
        eye = _eye_mask(tm, tm)
        o_ref[...] = jnp.sum(jnp.where(eye, lse - diag, 0.0),
                             axis=0, keepdims=True)                      # (1, tm)


def _vmem_capacity_bytes():
    """Physical VMEM per TensorCore; conservative default if unknown."""
    try:
        info = pltpu.get_tpu_info()
        cap = getattr(info, "vmem_capacity_bytes", None)
        if cap:
            return int(cap)
    except Exception:
        pass
    return 64 << 20  # v7x per-core VMEM (smallest current part)


def _pick_tm(n, itemsize, vmem_cap):
    """Largest row tile that fits the VMEM budget, preferring multiples of 128
    (aligned diagonal slices + lane-dense sub-writes)."""
    # f32 working set: double-buffered input block + widened f32 copy (only
    # when the input is narrower than f32).
    widen = 4 if itemsize < 4 else 0
    bytes_per_row = n * (2 * itemsize + widen)
    budget = min(64 << 20, vmem_cap // 2)      # ~32 MiB on v7x, ~64 MiB on v5e/v6e
    cap = max(8, budget // max(1, bytes_per_row))
    cap = min(cap, 1024, n)                    # 512-1024 rows already saturate HBM
    # Keep >= 2 grid steps for large matrices so v7x can shard the "parallel"
    # axis across both TensorCores (tiles stay >= 512 rows, no roofline loss
    # on 1-TC chips).
    cap128 = min(cap, n // 2) if n >= 1024 else cap

    t = (cap128 // _LANES) * _LANES
    while t >= _LANES:
        if n % t == 0:
            return t
        t -= _LANES
    # No 128-multiple divisor under the cap: fall back to multiples of 8.
    t = (cap // 8) * 8
    while t >= 8:
        if n % t == 0:
            return t
        t -= 8
    # Last resort: single full-height tile.
    # TODO(synk): column-blocked online logsumexp for very wide awkward N.
    return n


def cross_en(sim_matrix, *, tm=None):
    """Pallas implementation of CrossEn.forward. Returns a scalar f32 loss."""
    n, n2 = sim_matrix.shape
    assert n == n2, "sim_matrix must be square"
    itemsize = jnp.dtype(sim_matrix.dtype).itemsize
    vmem_cap = _vmem_capacity_bytes()
    if tm is None:
        tm = _pick_tm(n, itemsize, vmem_cap)
    assert n % tm == 0, "row tile must divide N"
    assert tm % 8 == 0 or tm == n, "row tile must be a multiple of 8 (or == N)"

    n_tiles = n // tm
    if n_tiles == 1:
        diag_mode = "single"
    elif tm % _LANES == 0:
        diag_mode = "subblock"
    else:
        diag_mode = "mask"

    kernel = functools.partial(_cross_en_kernel, tm=tm, n=n, diag_mode=diag_mode)

    # VMEM limit tracks the actual working set (double-buffered input block +
    # possible widened f32 copy + headroom), clamped to the chip's capacity.
    widen_bytes = tm * n * 4 if itemsize < 4 else 0
    req = 2 * tm * n * itemsize + widen_bytes + (4 << 20)
    vmem_bytes = max(32 << 20, req)
    vmem_bytes = min(vmem_bytes, max(32 << 20, vmem_cap - (8 << 20)))

    cost = pl.CostEstimate(
        flops=5 * n * n,
        transcendentals=n * n,
        bytes_accessed=n * n * itemsize + n * 4,
    )

    neg_logpt = pl.pallas_call(
        kernel,
        out_shape=jax.ShapeDtypeStruct((n_tiles, 1, tm), jnp.float32),
        grid_spec=pltpu.PrefetchScalarGridSpec(
            num_scalar_prefetch=0,
            grid=(n_tiles,),
            in_specs=[pl.BlockSpec((tm, n), lambda i: (i, 0))],
            # Lane-dense output: one (1, tm) row per grid step.
            out_specs=pl.BlockSpec((None, 1, tm), lambda i: (i, 0, 0)),
        ),
        compiler_params=pltpu.CompilerParams(
            dimension_semantics=("parallel",),   # row blocks are independent
            vmem_limit_bytes=int(vmem_bytes),
        ),
        cost_estimate=cost,
    )(sim_matrix)

    # Exactly N values in the output -> mean over rows (done in f32, wrapper-side).
    return jnp.mean(neg_logpt)


def cross_en_ref(sim_matrix):
    """Pure-JAX reference mirroring the PyTorch module."""
    logpt = jax.nn.log_softmax(sim_matrix.astype(jnp.float32), axis=-1)
    return -jnp.mean(jnp.diagonal(logpt))


if __name__ == "__main__":
    key = jax.random.PRNGKey(0)

    # Small square similarity matrix (e.g. a batch of 16 text/video pairs).
    N = 16
    sim = jax.random.normal(key, (N, N), dtype=jnp.float32)
    loss = jax.block_until_ready(cross_en(sim))
    ref = cross_en_ref(sim)
    assert jnp.allclose(loss, ref, atol=1e-5, rtol=1e-5), (loss, ref)

    # Exercise the multi-tile paths: 128-aligned diagonal sub-block path and
    # the (rare) unaligned mask fallback.
    N2 = 256
    sim2 = jax.random.normal(jax.random.PRNGKey(1), (N2, N2), dtype=jnp.float32)
    ref2 = cross_en_ref(sim2)
    loss2a = jax.block_until_ready(cross_en(sim2, tm=128))  # sub-block diag path
    loss2b = jax.block_until_ready(cross_en(sim2, tm=64))   # mask fallback path
    assert jnp.allclose(loss2a, ref2, atol=1e-5, rtol=1e-5), (loss2a, ref2)
    assert jnp.allclose(loss2b, ref2, atol=1e-5, rtol=1e-5), (loss2b, ref2)

    # bf16 input (kernel widens to f32 internally).
    sim3 = jax.random.normal(jax.random.PRNGKey(2), (128, 128), dtype=jnp.bfloat16)
    ref3 = cross_en_ref(sim3)
    loss3 = jax.block_until_ready(cross_en(sim3))
    assert jnp.allclose(loss3, ref3, atol=2e-2, rtol=2e-2), (loss3, ref3)

    print("KERNEL_OK")
</pallas_src>

<mosaic_0001>
module attributes {stable_mosaic.version = 11 : i64} {
  func.func @_cross_en_kernel(%arg0: i32, %arg1: memref<16x16xf32, #tpu.memory_space<vmem>>, %arg2: memref<1x1x16xf32, #tpu.memory_space<vmem>>) attributes {dimension_semantics = [#tpu.dimension_semantics<parallel>], iteration_bounds = array<i64: 1>, scalar_prefetch = 0 : i64, scratch_operands = 0 : i64, tpu.core_type = #tpu.core_type<tc>, window_params = [{transform_indices = @transform_0, window_bounds = array<i64: 16, 16>}, {transform_indices = @transform_1, window_bounds = array<i64: 1, 1, 16>}]} {
    %c0 = arith.constant 0 : index
    %c0_0 = arith.constant 0 : index
    %0 = vector.load %arg1[%c0, %c0_0] : memref<16x16xf32, #tpu.memory_space<vmem>>, vector<16x16xf32>
    %cst = arith.constant dense<0xFF800000> : vector<16xf32>
    %1 = vector.multi_reduction <maximumf>, %0, %cst [1] : vector<16x16xf32> to vector<16xf32>
    %2 = vector.shape_cast %1 : vector<16xf32> to vector<16x1xf32>
    %3 = vector.broadcast %2 : vector<16x1xf32> to vector<16x16xf32>
    %4 = arith.subf %0, %3 : vector<16x16xf32>
    %5 = math.exp %4 : vector<16x16xf32>
    %cst_1 = arith.constant dense<0.000000e+00> : vector<16xf32>
    %6 = vector.multi_reduction <add>, %5, %cst_1 [1] : vector<16x16xf32> to vector<16xf32>
    %7 = vector.shape_cast %6 : vector<16xf32> to vector<16x1xf32>
    %8 = math.log %7 : vector<16x1xf32>
    %9 = arith.addf %8, %2 : vector<16x1xf32>
    %10 = tpu.iota {dimensions = array<i32: 0>} : vector<16x16xi32>
    %11 = tpu.iota {dimensions = array<i32: 1>} : vector<16x16xi32>
    %12 = arith.cmpi eq, %10, %11 : vector<16x16xi32>
    %13 = vector.broadcast %9 : vector<16x1xf32> to vector<16x16xf32>
    %14 = arith.subf %13, %0 : vector<16x16xf32>
    %cst_2 = arith.constant 0.000000e+00 : f32
    %15 = vector.broadcast %cst_2 : f32 to vector<16x16xf32>
    %16 = arith.select %12, %14, %15 : vector<16x16xi1>, vector<16x16xf32>
    %cst_3 = arith.constant dense<0.000000e+00> : vector<16xf32>
    %17 = vector.multi_reduction <add>, %16, %cst_3 [0] : vector<16x16xf32> to vector<16xf32>
    %18 = vector.shape_cast %17 : vector<16xf32> to vector<1x16xf32>
    %c0_4 = arith.constant 0 : index
    %c0_5 = arith.constant 0 : index
    %c0_6 = arith.constant 0 : index
    %19 = vector.load %arg2[%c0_4, %c0_5, %c0_6] : memref<1x1x16xf32, #tpu.memory_space<vmem>>, vector<1x1x16xf32>
    %20 = vector.shape_cast %19 : vector<1x1x16xf32> to vector<1x16xf32>
    %21 = vector.shape_cast %18 : vector<1x16xf32> to vector<1x1x16xf32>
    tpu.vector_store %arg2[%c0_4, %c0_5, %c0_6], %21 {strides = array<i32>} : memref<1x1x16xf32, #tpu.memory_space<vmem>>, vector<1x1x16xf32>,
    return
  }
  func.func @transform_0(%arg0: i32) -> (i32, i32) {
    %c0_i32 = arith.constant 0 : i32
    %c0_i32_0 = arith.constant 0 : i32
    return %arg0, %c0_i32 : i32, i32
  }
  func.func @transform_1(%arg0: i32) -> (i32, i32, i32) {
    %c0_i32 = arith.constant 0 : i32
    %c0_i32_0 = arith.constant 0 : i32
    %c0_i32_1 = arith.constant 0 : i32
    return %arg0, %c0_i32, %c0_i32_0 : i32, i32, i32
  }
}

</mosaic_0001>

<llo_original>
// kernel: tpu_custom_call.1
$region0: #{tpu_custom_call.1}
  #allocation0 [shape = 'u32[]', space=smem, size = 0x4, offset = 0x4, fixed_abs, tag = 'smem constant byte address 0x4 - core index']
  #allocation1 [shape = 'u32[72,128]{1,0:T(1,128)}', space=vmem, size = 0x9000, scoped, tag = 'internal scratch']
  %s0 = inlined_call_operand.hbm [shape: f32[16,16], index: 0, kind: input, shape index: {}]
  %s1 = inlined_call_operand.hbm [shape: f32[1,1,16], index: 1, kind: output, shape index: {}]
  %s2 = sld [smem:[#allocation0]]
  $region18: #{tpu_custom_call.1} parent=0
    _
  %s4 = ssub.s32 1, %s2
  %s5 = scalar_select 0, %s4, %s2
  $region1: #{tpu_custom_call.1} parent=0
    #allocation2 [shape = 'u8[8192]{0}', space=vmem, size = 0x2000, scoped, tag = 'input window, operand 0, single buffered']
    #allocation3 [shape = 's32[1]{0}', space=sflag, size = 0x4, scoped, tag = 'scoped memory for tpu_custom_call.1']
    #allocation4 [shape = 's32[1]{0}', space=sflag, size = 0x4, scoped, tag = 'scoped memory for tpu_custom_call.1']
    #allocation5 [shape = 'u8[512]{0}', space=vmem, size = 0x400, scoped, tag = 'output window, operand 0, single buffered']
    %6 = vsyncpa [#allocation3], 0
    %7 = vsyncpa [#allocation4], 0
    // Predicated region
    $region2: #{tpu_custom_call.1} parent=1 // pred_check
      _
    $region3: #{tpu_custom_call.1} parent=1 // pred_check_branch
      %9 = sbr.rel (0) target = $region5
    $region4: #{tpu_custom_call.1} parent=1 // pred_region
      %11 = vsyncadd [#allocation3], 0
      %s12 = sshll.u32 %s0, 4
      %s13 = int_to_ptr.hbm [resolvable:$true] %s12
      %s14 = sshll.u32 [#allocation2], 4
      %s15 = int_to_ptr.vmem [resolvable:$true] %s14
      %20 = dma.hbm_to_vmem [thread:$0]  %s13, 256, %s15, [#allocation3], 128, 128, 8
    $region5: #{tpu_custom_call.1} parent=1 // pred_fallthru
      _
    // Predicated region
    $region6: #{tpu_custom_call.1} parent=1 // pred_check
      _
    $region7: #{tpu_custom_call.1} parent=1 // pred_check_branch
      %22 = sbr.rel (0) target = $region9
    $region8: #{tpu_custom_call.1} parent=1 // pred_region
      %24 = dma.done [#allocation3], 256
    $region9: #{tpu_custom_call.1} parent=1 // pred_fallthru
      _
    %v25 = vld [vmem:[#allocation2] sm:$0xff]
    %v26 = vld [vmem:[#allocation2 + $0x8] sm:$0xff]
    %vm27 = vcmask 130048
    %v28 = vsel %vm27, %v25, -inf
    %29 = vmax.xlane.f32.xlu0 %v28
    %v30 = vpop.xlane.xlu0 %29
    %v31 = vsel %vm27, %v26, -inf
    %32 = vmax.xlane.f32.xlu0 %v31
    %v33 = vpop.xlane.xlu0 %32
    %v34 = vsub.f32 %v25, %v30
    %v35 = vsub.f32 %v26, %v33
    %v36 = vmul.f32 %v34, 1.442695
    %v37 = vpow.pop %v36
    %v38 = vmul.f32 %v35, 1.442695
    %v39 = vpow.pop %v38
    %v40 = vsel %vm27, %v37, 0.0
    %41 = vadd.xlane.f32.xlu0 %v40
    %v42 = vpop.xlane.xlu0 %41
    %v43 = vsel %vm27, %v39, 0.0
    %44 = vadd.xlane.f32.xlu0 %v43
    %v45 = vpop.xlane.xlu0 %44
    %v46 = vlog2.pop %v42
    %v47 = vmul.f32 %v46, 0.6931472
    %v48 = vlog2.pop %v45
    %v49 = vmul.f32 %v48, 0.6931472
    %v50 = vadd.f32 %v47, %v30
    %v51 = vadd.f32 %v49, %v33
    %v52 = vlaneseq
    %v53 = vshrl.u32 %v52, 7
    %v54 = vadd.s32 %v53, 8
    %v55 = vlaneseq
    %v56 = vand.u32 %v55, 127
    %vm57 = vcmp.eq.s32.totalorder %v53, %v56
    %vm58 = vcmp.eq.s32.totalorder %v54, %v56
    %v59 = vsub.f32 %v50, %v25
    %v60 = vsub.f32 %v51, %v26
    %v61 = vsel %vm57, %v59, 0.0
    %v62 = vsel %vm58, %v60, 0.0
    %v63 = vsel %vm27, %v61, 0.0
    %v64 = vsel %vm27, %v62, 0.0
    %v65 = vadd.f32 %v63, %v64
    %v66 = vrot.slane %v65, 4
    %v67 = vadd.f32 %v65, %v66
    %v68 = vrot.slane %v67, 2
    %v69 = vadd.f32 %v67, %v68
    %v70 = vrot.slane %v69, 1
    %v71 = vadd.f32 %v69, %v70
    %vm72 = vcmask 122880
    %73 = vst.msk [vmem:[#allocation5] sm:$0x1] %vm72, %v71
    // Predicated region
    $region10: #{tpu_custom_call.1} parent=1 // pred_check
      _
    $region11: #{tpu_custom_call.1} parent=1 // pred_check_branch
      %75 = sbr.rel (0) target = $region13
    $region12: #{tpu_custom_call.1} parent=1 // pred_region
      %77 = vsyncadd [#allocation4], 0
      %s79 = sshll.u32 [#allocation5], 4
      %s80 = int_to_ptr.vmem [resolvable:$true] %s79
      %s81 = sshll.u32 %s1, 4
      %s82 = int_to_ptr.hbm [resolvable:$true] %s81
      %84 = dma.vmem_to_hbm [thread:$0]  %s80, 16, %s82, [#allocation4]
    $region13: #{tpu_custom_call.1} parent=1 // pred_fallthru
      _
    // Predicated region
    $region14: #{tpu_custom_call.1} parent=1 // pred_check
      _
    $region15: #{tpu_custom_call.1} parent=1 // pred_check_branch
      %86 = sbr.rel (0) target = $region17
    $region16: #{tpu_custom_call.1} parent=1 // pred_region
      %88 = dma.done [#allocation4], 16
    $region17: #{tpu_custom_call.1} parent=1 // pred_fallthru
      _
    %89 = vsyncpa [#allocation3], 1
    %90 = vsyncpa [#allocation4], 1

</llo_original>
